<compile_context>
chip_gen: v5e
topology: v5e:2x2
jax: 0.10.0
libtpu: 0.0.40
codegen_flags: <defaults>
</compile_context>

<pallas_src>
import functools

import jax
import jax.numpy as jnp
from jax import lax
from jax.experimental import pallas as pl
from jax.experimental.pallas import tpu as pltpu

_NEG_PAD = -1e30  # finite "minus infinity": exp underflows to 0, no NaNs


def _round_up(x: int, m: int) -> int:
    return (x + m - 1) // m * m


def _distill_kernel(tgt_ref, s_ref, t_ref, o_ref, acc_ref, *,
                    T: float, alpha: float, B: int, TB: int):
    i = pl.program_id(0)

    @pl.when(i == 0)
    def _():
        acc_ref[...] = jnp.zeros_like(acc_ref)

    s = s_ref[...].astype(jnp.float32)          # (TB, Cp) student logits
    t = t_ref[...].astype(jnp.float32)          # (TB, Cp) teacher logits
    tgt = tgt_ref[...]                          # (TB, 1) int32 targets
    TB_, Cp = s.shape
    inv_b = 1.0 / float(B)
    inv_T = 1.0 / float(T)

    cols = lax.broadcasted_iota(jnp.int32, (TB_, Cp), 1)
    onehot = (cols == tgt).astype(jnp.float32)

    # ---- Student T=1 softmax stats (single max reduce, reused below) ----
    m = jnp.max(s, axis=1, keepdims=True)
    z = s - m
    lse = jnp.log(jnp.sum(jnp.exp(z), axis=1, keepdims=True))

    # Cross entropy per row: -log_softmax(s)[i, tgt_i] = lse + m - s[i, tgt_i]
    ce_row = lse + m - jnp.sum(onehot * s, axis=1, keepdims=True)

    # ---- Student temperature-scaled log_softmax, reusing (s - m) ----
    zT = z * inv_T                              # max(s/T) == max(s)/T, reuse stats
    lseT = jnp.log(jnp.sum(jnp.exp(zT), axis=1, keepdims=True))
    logp_T = zT - lseT

    # ---- Teacher temperature-scaled softmax ----
    tT = t * inv_T
    mt = jnp.max(tT, axis=1, keepdims=True)
    zt = tT - mt
    et = jnp.exp(zt)                            # exact 0 in padded columns
    sum_et = jnp.sum(et, axis=1, keepdims=True)
    q = et * pl.reciprocal(sum_et, approx=False)
    logq = zt - jnp.log(sum_et)

    # KL(batchmean) per row: sum_j q_ij * (log q_ij - logp_T_ij)
    kl_row = jnp.sum(q * (logq - logp_T), axis=1, keepdims=True)

    # ---- Fused per-row combine, mask out batch-padding rows ----
    row_contrib = (alpha * inv_b) * ce_row \
        + ((1.0 - alpha) * T * T * inv_b) * kl_row
    row_idx = i * TB + lax.broadcasted_iota(jnp.int32, (TB_, 1), 0)
    row_contrib = jnp.where(row_idx < B, row_contrib, 0.0)

    acc_ref[...] += jnp.sum(row_contrib)

    @pl.when(i == pl.num_programs(0) - 1)
    def _():
        o_ref[...] = acc_ref[...]


def distill_loss(logits_s, logits_t, targets, *, T: float = 4.0, alpha: float = 0.5):
    assert logits_s.shape == logits_t.shape and logits_s.ndim == 2
    B, C = logits_s.shape

    # Lane-dense class axis.
    C_pad = _round_up(C, 128)

    # Batch tile: 2 logits inputs x 2 pipeline buffers x TB x C_pad x itemsize
    # kept under ~24 MiB so 2-deep pipelining fits comfortably on all
    # generations (v7x has 64 MiB VMEM per TC).
    itemsize = jnp.dtype(logits_s.dtype).itemsize
    budget_bytes = 24 * 1024 * 1024
    tb_cap = max(8, (budget_bytes // (4 * C_pad * itemsize)) // 8 * 8)
    TB = min(_round_up(B, 8), tb_cap, 2048)
    B_pad = _round_up(B, TB)
    num_tiles = B_pad // TB

    s_p = jnp.pad(logits_s, ((0, B_pad - B), (0, C_pad - C)),
                  constant_values=_NEG_PAD)
    t_p = jnp.pad(logits_t, ((0, B_pad - B), (0, C_pad - C)),
                  constant_values=_NEG_PAD)
    tgt_p = jnp.pad(targets.astype(jnp.int32), (0, B_pad - B)).reshape(B_pad, 1)

    kernel = functools.partial(_distill_kernel, T=float(T), alpha=float(alpha),
                               B=B, TB=TB)

    out = pl.pallas_call(
        kernel,
        out_shape=jax.ShapeDtypeStruct((1, 1), jnp.float32),
        grid=(num_tiles,),
        in_specs=[
            pl.BlockSpec((TB, 1), lambda i: (i, 0)),       # targets (int32)
            pl.BlockSpec((TB, C_pad), lambda i: (i, 0)),   # student logits
            pl.BlockSpec((TB, C_pad), lambda i: (i, 0)),   # teacher logits
        ],
        out_specs=pl.BlockSpec((1, 1), lambda i: (0, 0)),
        scratch_shapes=[pltpu.VMEM((1, 1), jnp.float32)],
        compiler_params=pltpu.CompilerParams(
            dimension_semantics=("arbitrary",),
            vmem_limit_bytes=48 * 1024 * 1024),
    )(tgt_p, s_p, t_p)
    return out[0, 0]


def _reference(logits_s, logits_t, targets, T=4.0, alpha=0.5):
    logp = jax.nn.log_softmax(logits_s, axis=1)
    ce = -jnp.mean(jnp.take_along_axis(logp, targets[:, None], axis=1))
    p_soft = jax.nn.log_softmax(logits_s / T, axis=1)
    q_soft = jax.nn.softmax(logits_t / T, axis=1)
    kl = jnp.sum(q_soft * (jnp.log(q_soft) - p_soft)) / logits_s.shape[0]
    return alpha * ce + (1.0 - alpha) * (T * T) * kl


if __name__ == "__main__":
    B, C = 8, 32
    key = jax.random.PRNGKey(0)
    ks, kt, ky = jax.random.split(key, 3)
    logits_s = jax.random.normal(ks, (B, C), dtype=jnp.float32) * 2.0
    logits_t = jax.random.normal(kt, (B, C), dtype=jnp.float32) * 2.0
    targets = jax.random.randint(ky, (B,), 0, C, dtype=jnp.int32)

    loss = distill_loss(logits_s, logits_t, targets, T=4.0, alpha=0.5)
    loss = jax.block_until_ready(loss)

    ref = _reference(logits_s, logits_t, targets, T=4.0, alpha=0.5)
    assert jnp.allclose(loss, ref, rtol=1e-5, atol=1e-5), (loss, ref)
    print("KERNEL_OK")
</pallas_src>

<mosaic_0001>
module attributes {stable_mosaic.version = 11 : i64} {
  func.func @_distill_kernel(%arg0: i32, %arg1: memref<8x1xi32, #tpu.memory_space<vmem>>, %arg2: memref<8x128xf32, #tpu.memory_space<vmem>>, %arg3: memref<8x128xf32, #tpu.memory_space<vmem>>, %arg4: memref<1x1xf32, #tpu.memory_space<vmem>>, %arg5: memref<1x1xf32, #tpu.memory_space<vmem>>) attributes {dimension_semantics = [#tpu.dimension_semantics<arbitrary>], iteration_bounds = array<i64: 1>, scalar_prefetch = 0 : i64, scratch_operands = 1 : i64, tpu.core_type = #tpu.core_type<tc>, window_params = [{transform_indices = @transform_0, window_bounds = array<i64: 8, 1>}, {transform_indices = @transform_1, window_bounds = array<i64: 8, 128>}, {transform_indices = @transform_2, window_bounds = array<i64: 8, 128>}, {pipeline_mode = #tpu.pipeline_mode<synchronous>, transform_indices = @transform_3, window_bounds = array<i64: 1, 1>}]} {
    %c0_i32 = arith.constant 0 : i32
    %0 = arith.cmpi eq, %arg0, %c0_i32 : i32
    %1 = arith.extui %0 : i1 to i32
    %c0_i32_0 = arith.constant 0 : i32
    %2 = arith.cmpi ne, %1, %c0_i32_0 : i32
    scf.if %2 {
      %cst_25 = arith.constant 0.000000e+00 : f32
      %75 = vector.broadcast %cst_25 : f32 to vector<1x1xf32>
      %c0_26 = arith.constant 0 : index
      %c0_27 = arith.constant 0 : index
      %76 = vector.load %arg5[%c0_26, %c0_27] : memref<1x1xf32, #tpu.memory_space<vmem>>, vector<1x1xf32>
      tpu.vector_store %arg5[%c0_26, %c0_27], %75 {strides = array<i32>} : memref<1x1xf32, #tpu.memory_space<vmem>>, vector<1x1xf32>,
    } else {
    }
    %c0 = arith.constant 0 : index
    %c0_1 = arith.constant 0 : index
    %3 = vector.load %arg2[%c0, %c0_1] : memref<8x128xf32, #tpu.memory_space<vmem>>, vector<8x128xf32>
    %c0_2 = arith.constant 0 : index
    %c0_3 = arith.constant 0 : index
    %4 = vector.load %arg3[%c0_2, %c0_3] : memref<8x128xf32, #tpu.memory_space<vmem>>, vector<8x128xf32>
    %c0_4 = arith.constant 0 : index
    %c0_5 = arith.constant 0 : index
    %5 = vector.load %arg1[%c0_4, %c0_5] : memref<8x1xi32, #tpu.memory_space<vmem>>, vector<8x1xi32>
    %6 = tpu.iota {dimensions = array<i32: 1>} : vector<8x128xi32>
    %7 = vector.broadcast %5 : vector<8x1xi32> to vector<8x128xi32>
    %8 = arith.cmpi eq, %6, %7 : vector<8x128xi32>
    %9 = arith.extui %8 : vector<8x128xi1> to vector<8x128xi32>
    %10 = arith.sitofp %9 : vector<8x128xi32> to vector<8x128xf32>
    %cst = arith.constant dense<0xFF800000> : vector<8xf32>
    %11 = vector.multi_reduction <maximumf>, %3, %cst [1] : vector<8x128xf32> to vector<8xf32>
    %12 = vector.shape_cast %11 : vector<8xf32> to vector<8x1xf32>
    %13 = vector.broadcast %12 : vector<8x1xf32> to vector<8x128xf32>
    %14 = arith.subf %3, %13 : vector<8x128xf32>
    %15 = math.exp %14 : vector<8x128xf32>
    %cst_6 = arith.constant dense<0.000000e+00> : vector<8xf32>
    %16 = vector.multi_reduction <add>, %15, %cst_6 [1] : vector<8x128xf32> to vector<8xf32>
    %17 = vector.shape_cast %16 : vector<8xf32> to vector<8x1xf32>
    %18 = math.log %17 : vector<8x1xf32>
    %19 = arith.addf %18, %12 : vector<8x1xf32>
    %20 = arith.mulf %10, %3 : vector<8x128xf32>
    %cst_7 = arith.constant dense<0.000000e+00> : vector<8xf32>
    %21 = vector.multi_reduction <add>, %20, %cst_7 [1] : vector<8x128xf32> to vector<8xf32>
    %22 = vector.shape_cast %21 : vector<8xf32> to vector<8x1xf32>
    %23 = arith.subf %19, %22 : vector<8x1xf32>
    %cst_8 = arith.constant 2.500000e-01 : f32
    %24 = vector.broadcast %cst_8 : f32 to vector<8x128xf32>
    %25 = arith.mulf %14, %24 : vector<8x128xf32>
    %26 = math.exp %25 : vector<8x128xf32>
    %cst_9 = arith.constant dense<0.000000e+00> : vector<8xf32>
    %27 = vector.multi_reduction <add>, %26, %cst_9 [1] : vector<8x128xf32> to vector<8xf32>
    %28 = vector.shape_cast %27 : vector<8xf32> to vector<8x1xf32>
    %29 = math.log %28 : vector<8x1xf32>
    %30 = vector.broadcast %29 : vector<8x1xf32> to vector<8x128xf32>
    %31 = arith.subf %25, %30 : vector<8x128xf32>
    %cst_10 = arith.constant 2.500000e-01 : f32
    %32 = vector.broadcast %cst_10 : f32 to vector<8x128xf32>
    %33 = arith.mulf %4, %32 : vector<8x128xf32>
    %cst_11 = arith.constant dense<0xFF800000> : vector<8xf32>
    %34 = vector.multi_reduction <maximumf>, %33, %cst_11 [1] : vector<8x128xf32> to vector<8xf32>
    %35 = vector.shape_cast %34 : vector<8xf32> to vector<8x1xf32>
    %36 = vector.broadcast %35 : vector<8x1xf32> to vector<8x128xf32>
    %37 = arith.subf %33, %36 : vector<8x128xf32>
    %38 = math.exp %37 : vector<8x128xf32>
    %cst_12 = arith.constant dense<0.000000e+00> : vector<8xf32>
    %39 = vector.multi_reduction <add>, %38, %cst_12 [1] : vector<8x128xf32> to vector<8xf32>
    %40 = vector.shape_cast %39 : vector<8xf32> to vector<8x1xf32>
    %41 = tpu.reciprocal %40 : vector<8x1xf32> -> vector<8x1xf32>
    %42 = vector.broadcast %41 : vector<8x1xf32> to vector<8x128xf32>
    %43 = arith.mulf %38, %42 : vector<8x128xf32>
    %44 = math.log %40 : vector<8x1xf32>
    %45 = vector.broadcast %44 : vector<8x1xf32> to vector<8x128xf32>
    %46 = arith.subf %37, %45 : vector<8x128xf32>
    %47 = arith.subf %46, %31 : vector<8x128xf32>
    %48 = arith.mulf %43, %47 : vector<8x128xf32>
    %cst_13 = arith.constant dense<0.000000e+00> : vector<8xf32>
    %49 = vector.multi_reduction <add>, %48, %cst_13 [1] : vector<8x128xf32> to vector<8xf32>
    %50 = vector.shape_cast %49 : vector<8xf32> to vector<8x1xf32>
    %cst_14 = arith.constant 6.250000e-02 : f32
    %51 = vector.broadcast %cst_14 : f32 to vector<8x1xf32>
    %52 = arith.mulf %51, %23 : vector<8x1xf32>
    %cst_15 = arith.constant 1.000000e+00 : f32
    %53 = vector.broadcast %cst_15 : f32 to vector<8x1xf32>
    %54 = arith.mulf %53, %50 : vector<8x1xf32>
    %55 = arith.addf %52, %54 : vector<8x1xf32>
    %c8_i32 = arith.constant 8 : i32
    %56 = arith.muli %arg0, %c8_i32 : i32
    %57 = tpu.iota {dimensions = array<i32: 0>} : vector<8x1xi32>
    %58 = vector.broadcast %56 : i32 to vector<8x1xi32>
    %59 = arith.addi %58, %57 : vector<8x1xi32>
    %c8_i32_16 = arith.constant 8 : i32
    %60 = vector.broadcast %c8_i32_16 : i32 to vector<8x1xi32>
    %61 = arith.cmpi slt, %59, %60 : vector<8x1xi32>
    %cst_17 = arith.constant 0.000000e+00 : f32
    %62 = vector.broadcast %cst_17 : f32 to vector<8x1xf32>
    %63 = arith.select %61, %55, %62 : vector<8x1xi1>, vector<8x1xf32>
    %c0_18 = arith.constant 0 : index
    %c0_19 = arith.constant 0 : index
    %64 = vector.load %arg5[%c0_18, %c0_19] : memref<1x1xf32, #tpu.memory_space<vmem>>, vector<1x1xf32>
    %65 = vector.shape_cast %63 : vector<8x1xf32> to vector<1x8x1xf32>
    %cst_20 = arith.constant dense<0.000000e+00> : vector<1xf32>
    %66 = vector.multi_reduction <add>, %65, %cst_20 [1, 2] : vector<1x8x1xf32> to vector<1xf32>
    %67 = vector.shape_cast %66 : vector<1xf32> to vector<1x1x1xf32>
    %68 = vector.extract %67[0, 0, 0] : f32 from vector<1x1x1xf32>
    %69 = vector.broadcast %68 : f32 to vector<1x1xf32>
    %70 = arith.addf %64, %69 : vector<1x1xf32>
    %c0_21 = arith.constant 0 : index
    %c0_22 = arith.constant 0 : index
    %71 = vector.load %arg5[%c0_21, %c0_22] : memref<1x1xf32, #tpu.memory_space<vmem>>, vector<1x1xf32>
    tpu.vector_store %arg5[%c0_21, %c0_22], %70 {strides = array<i32>} : memref<1x1xf32, #tpu.memory_space<vmem>>, vector<1x1xf32>,
    %c0_i32_23 = arith.constant 0 : i32
    %72 = arith.cmpi eq, %arg0, %c0_i32_23 : i32
    %73 = arith.extui %72 : i1 to i32
    %c0_i32_24 = arith.constant 0 : i32
    %74 = arith.cmpi ne, %73, %c0_i32_24 : i32
    scf.if %74 {
      %c0_25 = arith.constant 0 : index
      %c0_26 = arith.constant 0 : index
      %75 = vector.load %arg5[%c0_25, %c0_26] : memref<1x1xf32, #tpu.memory_space<vmem>>, vector<1x1xf32>
      %c0_27 = arith.constant 0 : index
      %c0_28 = arith.constant 0 : index
      %76 = vector.load %arg4[%c0_27, %c0_28] : memref<1x1xf32, #tpu.memory_space<vmem>>, vector<1x1xf32>
      tpu.vector_store %arg4[%c0_27, %c0_28], %75 {strides = array<i32>} : memref<1x1xf32, #tpu.memory_space<vmem>>, vector<1x1xf32>,
    } else {
    }
    return
  }
  func.func @transform_0(%arg0: i32) -> (i32, i32) {
    %c0_i32 = arith.constant 0 : i32
    %c0_i32_0 = arith.constant 0 : i32
    return %arg0, %c0_i32 : i32, i32
  }
  func.func @transform_1(%arg0: i32) -> (i32, i32) {
    %c0_i32 = arith.constant 0 : i32
    %c0_i32_0 = arith.constant 0 : i32
    return %arg0, %c0_i32 : i32, i32
  }
  func.func @transform_2(%arg0: i32) -> (i32, i32) {
    %c0_i32 = arith.constant 0 : i32
    %c0_i32_0 = arith.constant 0 : i32
    return %arg0, %c0_i32 : i32, i32
  }
  func.func @transform_3(%arg0: i32) -> (i32, i32) {
    %c0_i32 = arith.constant 0 : i32
    %c0_i32_0 = arith.constant 0 : i32
    %c0_i32_1 = arith.constant 0 : i32
    return %c0_i32, %c0_i32_0 : i32, i32
  }
}

</mosaic_0001>

<llo_original>
// kernel: tpu_custom_call.1
$region0: #{tpu_custom_call.1}
  #allocation0 [shape = 'u32[]', space=smem, size = 0x4, offset = 0x4, fixed_abs, tag = 'smem constant byte address 0x4 - core index']
  #allocation1 [shape = 'u32[72,128]{1,0:T(1,128)}', space=vmem, size = 0x9000, scoped, tag = 'internal scratch']
  #allocation2 [shape = 'f32[1,1]{1,0:T(1,128)}', space=vmem, size = 0x200, scoped, tag = 'scratch operand']
  %s0 = inlined_call_operand.vmem [shape: s32[8,1], index: 0, kind: input, shape index: {}]
  %s1 = inlined_call_operand.vmem [shape: f32[8,128], index: 1, kind: input, shape index: {}]
  %s2 = inlined_call_operand.hbm [shape: f32[8,128], index: 2, kind: input, shape index: {}]
  %s3 = inlined_call_operand.hbm [shape: f32[1,1], index: 3, kind: output, shape index: {}]
  %s4 = sld [smem:[#allocation0]]
  $region34: #{tpu_custom_call.1} parent=0
    _
  %s6 = ssub.s32 1, %s4
  %s7 = scalar_select 0, %s6, %s4
  $region1: #{tpu_custom_call.1} parent=0
    #allocation3 [shape = 'u8[4096]{0}', space=vmem, size = 0x1000, scoped, tag = 'input window, operand 2, single buffered']
    #allocation4 [shape = 's32[1]{0}', space=sflag, size = 0x4, scoped, tag = 'scoped memory for tpu_custom_call.1']
    #allocation5 [shape = 's32[1]{0}', space=sflag, size = 0x4, scoped, tag = 'scoped memory for tpu_custom_call.1']
    #allocation6 [shape = 'u8[512]{0}', space=vmem, size = 0x400, scoped, tag = 'output window, operand 0, single buffered']
    %8 = vsyncpa [#allocation4], 0
    %9 = vsyncpa [#allocation5], 0
    // Predicated region
    $region2: #{tpu_custom_call.1} parent=1 // pred_check
      _
    $region3: #{tpu_custom_call.1} parent=1 // pred_check_branch
      %11 = sbr.rel (0) target = $region5
    $region4: #{tpu_custom_call.1} parent=1 // pred_region
      _
    $region5: #{tpu_custom_call.1} parent=1 // pred_fallthru
      _
    // Predicated region
    $region6: #{tpu_custom_call.1} parent=1 // pred_check
      _
    $region7: #{tpu_custom_call.1} parent=1 // pred_check_branch
      %13 = sbr.rel (0) target = $region9
    $region8: #{tpu_custom_call.1} parent=1 // pred_region
      _
    $region9: #{tpu_custom_call.1} parent=1 // pred_fallthru
      _
    // Predicated region
    $region10: #{tpu_custom_call.1} parent=1 // pred_check
      _
    $region11: #{tpu_custom_call.1} parent=1 // pred_check_branch
      %15 = sbr.rel (0) target = $region13
    $region12: #{tpu_custom_call.1} parent=1 // pred_region
      %17 = vsyncadd [#allocation4], 0
      %s19 = sshll.u32 %s2, 4
      %s20 = int_to_ptr.hbm [resolvable:$true] %s19
      %s21 = sshll.u32 [#allocation3], 4
      %s22 = int_to_ptr.vmem [resolvable:$true] %s21
      %24 = dma.hbm_to_vmem [thread:$0]  %s20, 128, %s22, [#allocation4]
    $region13: #{tpu_custom_call.1} parent=1 // pred_fallthru
      _
    // Predicated region
    $region14: #{tpu_custom_call.1} parent=1 // pred_check
      _
    $region15: #{tpu_custom_call.1} parent=1 // pred_check_branch
      %26 = sbr.rel (0) target = $region17
    $region16: #{tpu_custom_call.1} parent=1 // pred_region
      %28 = dma.done [#allocation4], 128
    $region17: #{tpu_custom_call.1} parent=1 // pred_fallthru
      _
    %p29 = scmp.eq.s32.totalorder 0, 0
    // Predicated region
    $region18: #{tpu_custom_call.1} parent=1 // pred_check
      %p30 = pneg %p29
    $region19: #{tpu_custom_call.1} parent=1 // pred_check_branch
      %32 = sbr.rel (%p30) target = $region21
    $region20: #{tpu_custom_call.1} parent=1 // pred_region
      %vm33 = vcmask 0
      %34 = vst.msk [vmem:[#allocation2] sm:$0x1] %vm33, 0.0
    $region21: #{tpu_custom_call.1} parent=1 // pred_fallthru
      _
    %v35 = vld [vmem:[%s1] sm:$0xff]
    %v36 = vld [vmem:[#allocation3] sm:$0xff]
    %v37 = vld [vmem:[%s0] sm:$0xff]
    %v38 = vlaneseq
    %v39 = vand.u32 %v38, 127
    %40 = vset.pattern.permute.xlu0 0
    %41 = vperm.xlu0 %40, %v37
    %v42 = vpop.permute.xlu0 %41
    %vm43 = vcmp.eq.s32.totalorder %v39, %v42
    %v44 = vsel %vm43, 1, 0
    %v45 = vcvt.s32.f32 %v44
    %46 = vmax.xlane.f32.xlu0 %v35
    %v47 = vpop.xlane.xlu0 %46
    %v48 = vsub.f32 %v35, %v47
    %v49 = vmul.f32 %v48, 1.442695
    %v50 = vpow.pop %v49
    %51 = vadd.xlane.f32.xlu0 %v50
    %v52 = vpop.xlane.xlu0 %51
    %v53 = vlog2.pop %v52
    %v54 = vmul.f32 %v53, 0.6931472
    %v55 = vadd.f32 %v54, %v47
    %v56 = vmul.f32 %v45, %v35
    %57 = vadd.xlane.f32.xlu0 %v56
    %v58 = vpop.xlane.xlu0 %57
    %v59 = vsub.f32 %v55, %v58
    %v60 = vmul.f32 %v48, 0.25
    %v61 = vmul.f32 %v60, 1.442695
    %v62 = vpow.pop %v61
    %63 = vadd.xlane.f32.xlu0 %v62
    %v64 = vpop.xlane.xlu0 %63
    %v65 = vlog2.pop %v64
    %v66 = vmul.f32 %v65, 0.6931472
    %v67 = vsub.f32 %v60, %v66
    %v68 = vmul.f32 %v36, 0.25
    %69 = vmax.xlane.f32.xlu0 %v68
    %v70 = vpop.xlane.xlu0 %69
    %v71 = vsub.f32 %v68, %v70
    %v72 = vmul.f32 %v71, 1.442695
    %v73 = vpow.pop %v72
    %74 = vadd.xlane.f32.xlu0 %v73
    %v75 = vpop.xlane.xlu0 %74
    %v76 = vrcp.pop %v75
    %v77 = vmul.f32 %v75, %v76
    %v78 = vsub.f32 1.0, %v77
    %v79 = vmul.f32 %v76, %v78
    %v80 = vadd.f32 %v76, %v79
    %vm81 = vweird.f32 %v75
    %vm82 = vweird.f32 %v76
    %vm83 = vmor %vm81, %vm82
    %v84 = vsel %vm83, %v76, %v80
    %v85 = vand.u32 2147483647, %v75
    %vm86 = vcmp.eq.f32.partialorder %v85, 8.507059e+37
    %v87 = vand.u32 %v75, 2147483648
    %v88 = vor.u32 1.1754944e-38, %v87
    %v89 = vsel %vm86, %v88, %v84
    %v90 = vmul.f32 %v73, %v89
    %v91 = vlog2.pop %v75
    %v92 = vmul.f32 %v91, 0.6931472
    %v93 = vsub.f32 %v71, %v92
    %v94 = vsub.f32 %v93, %v67
    %v95 = vmul.f32 %v90, %v94
    %96 = vadd.xlane.f32.xlu0 %v95
    %v97 = vpop.xlane.xlu0 %96
    %v98 = vmul.f32 %v59, 0.0625
    %v99 = vadd.f32 %v98, %v97
    %s100 = smul.u32 0, 8
    %v101 = vlaneseq
    %v102 = vshrl.u32 %v101, 7
    %v103 = vstv %s100
    %v104 = vadd.s32 %v103, %v102
    %vm105 = vcmp.lt.s32.totalorder %v104, 8
    %v106 = vsel %vm105, %v99, 0.0
    %v107 = vld [vmem:[#allocation2] sm:$0x1]
    %vm108 = vcmask 7168
    %v109 = vsel %vm108, %v106, 0.0
    %110 = vadd.xlane.f32.xlu0 %v109
    %v111 = vpop.xlane.xlu0 %110
    %v112 = vrot.slane %v111, 4
    %v113 = vadd.f32 %v111, %v112
    %v114 = vrot.slane %v113, 2
    %v115 = vadd.f32 %v113, %v114
    %v116 = vrot.slane %v115, 1
    %v117 = vadd.f32 %v115, %v116
    %s118 = vtos %v117
    %v119 = vstv %s118
    %v120 = vadd.f32 %v107, %v119
    %vm121 = vcmask 0
    %122 = vst.msk [vmem:[#allocation2] sm:$0x1] %vm121, %v120
    // Predicated region
    $region22: #{tpu_custom_call.1} parent=1 // pred_check
      %p123 = pneg %p29
    $region23: #{tpu_custom_call.1} parent=1 // pred_check_branch
      %125 = sbr.rel (%p123) target = $region25
    $region24: #{tpu_custom_call.1} parent=1 // pred_region
      %v126 = vld [vmem:[#allocation2] sm:$0x1]
      %127 = vst.msk [vmem:[#allocation6] sm:$0x1] %vm121, %v126
    $region25: #{tpu_custom_call.1} parent=1 // pred_fallthru
      _
    // Predicated region
    $region26: #{tpu_custom_call.1} parent=1 // pred_check
      _
    $region27: #{tpu_custom_call.1} parent=1 // pred_check_branch
      %129 = sbr.rel (0) target = $region29
    $region28: #{tpu_custom_call.1} parent=1 // pred_region
      %131 = vsyncadd [#allocation5], 0
      %s133 = sshll.u32 [#allocation6], 4
      %s134 = int_to_ptr.vmem [resolvable:$true] %s133
      %s135 = sshll.u32 %s3, 4
      %s136 = int_to_ptr.hbm [resolvable:$true] %s135
      %138 = dma.vmem_to_hbm [thread:$0]  %s134, 16, %s136, [#allocation5]
    $region29: #{tpu_custom_call.1} parent=1 // pred_fallthru
      _
    // Predicated region
    $region30: #{tpu_custom_call.1} parent=1 // pred_check
      _
    $region31: #{tpu_custom_call.1} parent=1 // pred_check_branch
      %140 = sbr.rel (0) target = $region33
    $region32: #{tpu_custom_call.1} parent=1 // pred_region
      %142 = dma.done [#allocation5], 16
    $region33: #{tpu_custom_call.1} parent=1 // pred_fallthru
      _
    %143 = vsyncpa [#allocation4], 1
    %144 = vsyncpa [#allocation5], 1

</llo_original>
